<compile_context>
chip_gen: v7x
topology: tpu7x:2x2x1
jax: 0.10.0
libtpu: 0.0.40
codegen_flags: <defaults>
</compile_context>

<pallas_src>
import math

import jax
import jax.numpy as jnp
from jax.experimental import pallas as pl
from jax.experimental.pallas import tpu as pltpu


def _pe_kernel(pos_ref, expand_ref, phase_ref, out_ref):
    # pos_ref   : (TR, K)  int32/f32  K consecutive position ids per packed row
    # expand_ref: (K, W)   f32        row j: freq scale on lanes [j*D, (j+1)*D), 0 elsewhere
    # phase_ref : (1, W)   f32        0.0 at even features, pi/2 at odd (tiled K times)
    # out_ref   : (TR, W)  f32        W = K * d_model
    p = pos_ref[...].astype(jnp.float32)      # in-kernel cast: free VPU op
    e = expand_ref[...]
    k = p.shape[1]
    # Exact expansion of the K positions across their D-lane groups: every output lane
    # receives exactly one f32 multiply; all other terms are exact zeros.  Static unroll.
    arg = phase_ref[...] + p[:, 0:1] * e[0:1, :]
    for j in range(1, k):
        arg = arg + p[:, j:j + 1] * e[j:j + 1, :]
    # cos(x) == sin(x + pi/2): exactly one EUP transcendental per stored element.
    out_ref[...] = jnp.sin(arg)


def absolute_positional_encoding(positions, d_model: int,
                                 dropout_prob: float = 0.1,
                                 w_k_constant: float = 10000.0,
                                 target_block_bytes: int = 4 * 1024 * 1024):
    """positions: [B, S] int (or float) position ids -> [B, S, d_model] f32."""
    del dropout_prob  # TODO(synk): training-mode dropout not implemented (eval = identity)
    B, S = positions.shape
    N = B * S

    # Hoisted per-feature constants (tiny, O(d_model) each).
    d_idx = jnp.arange(d_model, dtype=jnp.int32)
    two_k = (d_idx // 2) * 2                  # even/odd feature pairs share a frequency
    scale_row = jnp.exp(two_k.astype(jnp.float32) *
                        (-math.log(w_k_constant) / float(d_model)))                 # (D,)
    phase_row = jnp.where(d_idx % 2 == 0, 0.0, math.pi / 2.0).astype(jnp.float32)   # (D,)

    # Lane-dense packing: K consecutive positions per kernel row so the output row
    # width W = K*D is a multiple of 128 lanes (unmasked, dense vst / writeback DMA).
    if d_model % 128 == 0:
        k = 1
    else:
        k = 128 // math.gcd(d_model, 128)
        if k > N or N % k != 0:
            k = 1                             # fallback: lane-sparse stores, still correct
    W = k * d_model
    rows = N // k

    # Flatten/pack positions; keep integer dtype (cast to f32 happens inside the kernel).
    if jnp.issubdtype(positions.dtype, jnp.floating):
        pos2d = positions.reshape(rows, k).astype(jnp.float32)
    else:
        pos2d = positions.reshape(rows, k).astype(jnp.int32)

    if k == 1:
        expand = scale_row.reshape(1, W)
        phase = phase_row.reshape(1, W)
    else:
        # expand[j, j*D + d] = scale_row[d], zero elsewhere (block diagonal).
        expand = (jnp.eye(k, dtype=jnp.float32)[:, :, None] *
                  scale_row[None, None, :]).reshape(k, W)
        phase = jnp.tile(phase_row, (k,)).reshape(1, W)

    # Row tile: ~target_block_bytes of f32 output per grid step (x2 double-buffering).
    max_rows = max(8, target_block_bytes // (W * 4))
    if rows >= 32:
        # Keep >= ~4 grid steps so the output pipeline / megacore sharding engage.
        max_rows = min(max_rows, max(8, pl.cdiv(rows, 4)))
    tr = min(max_rows, rows)
    if tr >= 8:
        tr = (tr // 8) * 8                    # (8,128) sublane constraint
    # else: tr == rows < 8, allowed because it equals the full array dim
    grid = (pl.cdiv(rows, tr),)

    out2d = pl.pallas_call(
        _pe_kernel,
        out_shape=jax.ShapeDtypeStruct((rows, W), jnp.float32),
        grid=grid,
        in_specs=[
            pl.BlockSpec((tr, k), lambda i: (i, 0)),     # packed position ids (tiny reads)
            pl.BlockSpec((k, W), lambda i: (0, 0)),      # block-diagonal freq scales
            pl.BlockSpec((1, W), lambda i: (0, 0)),      # sin/cos phase offsets
        ],
        out_specs=pl.BlockSpec((tr, W), lambda i: (i, 0)),
        compiler_params=pltpu.CompilerParams(
            dimension_semantics=("parallel",),           # megacore-shardable on v7x
            vmem_limit_bytes=32 * 1024 * 1024),          # headroom for 2x4MiB out + temps (v5e default is 16MiB)
    )(pos2d, expand, phase)

    # Dropout (eval mode) is the identity; reshapes are flat reinterprets.
    return out2d.reshape(B, S, d_model)


def _reference(positions, d_model, w_k_constant=10000.0):
    """Pure-JAX reference reproducing the PyTorch forward (eval mode)."""
    B, S = positions.shape
    p = positions.astype(jnp.float32)                                   # [B, S]
    div_term = jnp.exp(jnp.arange(0, d_model, 2, dtype=jnp.float32)
                       * (-math.log(w_k_constant) / d_model))           # [D/2]
    args = p[:, :, None] * div_term[None, None, :]                      # [B, S, D/2]
    pe = jnp.zeros((B, S, d_model), jnp.float32)
    pe = pe.at[:, :, 0::2].set(jnp.sin(args))
    pe = pe.at[:, :, 1::2].set(jnp.cos(args))
    return pe


if __name__ == "__main__":
    key = jax.random.PRNGKey(0)
    B, S = 2, 8
    positions = jax.random.randint(key, (B, S), minval=0, maxval=1000,
                                   dtype=jnp.int32)

    # D=32 exercises the lane-dense packed path (k=4, W=128);
    # D=128 exercises the native k=1 path.
    for D in (32, 128):
        out = absolute_positional_encoding(positions, d_model=D)
        out = jax.block_until_ready(out)
        ref = _reference(positions, D)

        assert out.shape == (B, S, D), out.shape
        assert out.dtype == jnp.float32
        # Even (sin) features: kernel arguments are bit-identical to the reference.
        assert jnp.allclose(out[..., 0::2], ref[..., 0::2], atol=1e-5, rtol=0.0), \
            float(jnp.max(jnp.abs(out[..., 0::2] - ref[..., 0::2])))
        # Odd (cos) features use sin(x + pi/2); deviation is bounded by ~ULP(|x|)/2
        # (~3e-5 for position*freq < 1000), well inside 2e-4.
        assert jnp.allclose(out, ref, atol=2e-4, rtol=0.0), \
            float(jnp.max(jnp.abs(out - ref)))

    print("KERNEL_OK")
</pallas_src>

<mosaic_0001>
module attributes {stable_mosaic.version = 11 : i64} {
  func.func @_pe_kernel(%arg0: i32, %arg1: memref<4x4xi32, #tpu.memory_space<vmem>>, %arg2: memref<4x128xf32, #tpu.memory_space<vmem>>, %arg3: memref<1x128xf32, #tpu.memory_space<vmem>>, %arg4: memref<4x128xf32, #tpu.memory_space<vmem>>) attributes {dimension_semantics = [#tpu.dimension_semantics<parallel>], iteration_bounds = array<i64: 1>, scalar_prefetch = 0 : i64, scratch_operands = 0 : i64, tpu.core_type = #tpu.core_type<tc>, window_params = [{transform_indices = @transform_0, window_bounds = array<i64: 4, 4>}, {pipeline_mode = #tpu.pipeline_mode<synchronous>, transform_indices = @transform_1, window_bounds = array<i64: 4, 128>}, {pipeline_mode = #tpu.pipeline_mode<synchronous>, transform_indices = @transform_2, window_bounds = array<i64: 1, 128>}, {transform_indices = @transform_3, window_bounds = array<i64: 4, 128>}]} {
    %c0 = arith.constant 0 : index
    %c0_0 = arith.constant 0 : index
    %0 = vector.load %arg1[%c0, %c0_0] : memref<4x4xi32, #tpu.memory_space<vmem>>, vector<4x4xi32>
    %1 = arith.sitofp %0 : vector<4x4xi32> to vector<4x4xf32>
    %c0_1 = arith.constant 0 : index
    %c0_2 = arith.constant 0 : index
    %2 = vector.load %arg2[%c0_1, %c0_2] : memref<4x128xf32, #tpu.memory_space<vmem>>, vector<4x128xf32>
    %c0_3 = arith.constant 0 : index
    %c0_4 = arith.constant 0 : index
    %3 = vector.load %arg3[%c0_3, %c0_4] : memref<1x128xf32, #tpu.memory_space<vmem>>, vector<1x128xf32>
    %4 = vector.extract_strided_slice %1 {offsets = [0, 0], sizes = [4, 1], strides = [1, 1]} : vector<4x4xf32> to vector<4x1xf32>
    %5 = vector.extract_strided_slice %2 {offsets = [0, 0], sizes = [1, 128], strides = [1, 1]} : vector<4x128xf32> to vector<1x128xf32>
    %6 = vector.broadcast %4 : vector<4x1xf32> to vector<4x128xf32>
    %7 = vector.broadcast %5 : vector<1x128xf32> to vector<4x128xf32>
    %8 = arith.mulf %6, %7 : vector<4x128xf32>
    %9 = vector.broadcast %3 : vector<1x128xf32> to vector<4x128xf32>
    %10 = arith.addf %9, %8 : vector<4x128xf32>
    %11 = vector.extract_strided_slice %1 {offsets = [0, 1], sizes = [4, 1], strides = [1, 1]} : vector<4x4xf32> to vector<4x1xf32>
    %12 = vector.extract_strided_slice %2 {offsets = [1, 0], sizes = [1, 128], strides = [1, 1]} : vector<4x128xf32> to vector<1x128xf32>
    %13 = vector.broadcast %11 : vector<4x1xf32> to vector<4x128xf32>
    %14 = vector.broadcast %12 : vector<1x128xf32> to vector<4x128xf32>
    %15 = arith.mulf %13, %14 : vector<4x128xf32>
    %16 = arith.addf %10, %15 : vector<4x128xf32>
    %17 = vector.extract_strided_slice %1 {offsets = [0, 2], sizes = [4, 1], strides = [1, 1]} : vector<4x4xf32> to vector<4x1xf32>
    %18 = vector.extract_strided_slice %2 {offsets = [2, 0], sizes = [1, 128], strides = [1, 1]} : vector<4x128xf32> to vector<1x128xf32>
    %19 = vector.broadcast %17 : vector<4x1xf32> to vector<4x128xf32>
    %20 = vector.broadcast %18 : vector<1x128xf32> to vector<4x128xf32>
    %21 = arith.mulf %19, %20 : vector<4x128xf32>
    %22 = arith.addf %16, %21 : vector<4x128xf32>
    %23 = vector.extract_strided_slice %1 {offsets = [0, 3], sizes = [4, 1], strides = [1, 1]} : vector<4x4xf32> to vector<4x1xf32>
    %24 = vector.extract_strided_slice %2 {offsets = [3, 0], sizes = [1, 128], strides = [1, 1]} : vector<4x128xf32> to vector<1x128xf32>
    %25 = vector.broadcast %23 : vector<4x1xf32> to vector<4x128xf32>
    %26 = vector.broadcast %24 : vector<1x128xf32> to vector<4x128xf32>
    %27 = arith.mulf %25, %26 : vector<4x128xf32>
    %28 = arith.addf %22, %27 : vector<4x128xf32>
    %29 = math.sin %28 : vector<4x128xf32>
    %c0_5 = arith.constant 0 : index
    %c0_6 = arith.constant 0 : index
    %30 = vector.load %arg4[%c0_5, %c0_6] : memref<4x128xf32, #tpu.memory_space<vmem>>, vector<4x128xf32>
    tpu.vector_store %arg4[%c0_5, %c0_6], %29 {strides = array<i32>} : memref<4x128xf32, #tpu.memory_space<vmem>>, vector<4x128xf32>,
    return
  }
  func.func @transform_0(%arg0: i32) -> (i32, i32) {
    %c0_i32 = arith.constant 0 : i32
    %c0_i32_0 = arith.constant 0 : i32
    return %arg0, %c0_i32 : i32, i32
  }
  func.func @transform_1(%arg0: i32) -> (i32, i32) {
    %c0_i32 = arith.constant 0 : i32
    %c0_i32_0 = arith.constant 0 : i32
    %c0_i32_1 = arith.constant 0 : i32
    return %c0_i32, %c0_i32_0 : i32, i32
  }
  func.func @transform_2(%arg0: i32) -> (i32, i32) {
    %c0_i32 = arith.constant 0 : i32
    %c0_i32_0 = arith.constant 0 : i32
    %c0_i32_1 = arith.constant 0 : i32
    return %c0_i32, %c0_i32_0 : i32, i32
  }
  func.func @transform_3(%arg0: i32) -> (i32, i32) {
    %c0_i32 = arith.constant 0 : i32
    %c0_i32_0 = arith.constant 0 : i32
    return %arg0, %c0_i32 : i32, i32
  }
}

</mosaic_0001>

<llo_original>
// kernel: tpu_custom_call.1
$region0: #{tpu_custom_call.1}
  #allocation0 [shape = 'u32[]', space=smem, size = 0x4, offset = 0x4, fixed_abs, tag = 'smem constant byte address 0x4 - core index']
  #allocation1 [shape = 'u32[144,128]{1,0:T(1,128)}', space=vmem, size = 0x12000, scoped, tag = 'internal scratch']
  %s0 = inlined_call_operand.hbm [shape: s32[4,4], index: 0, kind: input, shape index: {}]
  %s1 = inlined_call_operand.hbm [shape: f32[4,128], index: 1, kind: input, shape index: {}]
  %s2 = inlined_call_operand.vmem [shape: f32[1,128], index: 2, kind: input, shape index: {}]
  %s3 = inlined_call_operand.hbm [shape: f32[4,128], index: 3, kind: output, shape index: {}]
  %s4 = sld [smem:[#allocation0]]
  $region30: #{tpu_custom_call.1} parent=0
    _
  %s6 = ssub.s32 1, %s4
  %s7 = scalar_select 0, %s6, %s4
  $region1: #{tpu_custom_call.1} parent=0
    #allocation2 [shape = 'u8[2048]{0}', space=vmem, size = 0x800, scoped, tag = 'input window, operand 0, single buffered']
    #allocation3 [shape = 's32[1]{0}', space=sflag, size = 0x4, scoped, tag = 'scoped memory for tpu_custom_call.1']
    #allocation4 [shape = 's32[1]{0}', space=sflag, size = 0x4, scoped, tag = 'scoped memory for tpu_custom_call.1']
    #allocation5 [shape = 'u8[2048]{0}', space=vmem, size = 0x800, scoped, tag = 'input window, operand 1, single buffered']
    #allocation6 [shape = 's32[1]{0}', space=sflag, size = 0x4, scoped, tag = 'scoped memory for tpu_custom_call.1']
    #allocation7 [shape = 'u8[2048]{0}', space=vmem, size = 0x800, scoped, tag = 'output window, operand 0, single buffered']
    %8 = vsyncpa [#allocation3], 0
    %9 = vsyncpa [#allocation6], 0
    %10 = vsyncpa [#allocation4], 0
    // Predicated region
    $region2: #{tpu_custom_call.1} parent=1 // pred_check
      _
    $region3: #{tpu_custom_call.1} parent=1 // pred_check_branch
      %12 = sbr.rel (0) target = $region5
    $region4: #{tpu_custom_call.1} parent=1 // pred_region
      %s14 = ssub.s32 64, 64
      %15 = vsyncadd [#allocation3], %s14
      %s17 = sshll.u32 [#allocation2], 4
      %s18 = int_to_ptr.vmem [resolvable:$true] %s17
      %20 = dma.hbm_to_vmem [thread:$0]  %s0, 64, %s18, [#allocation3]
    $region5: #{tpu_custom_call.1} parent=1 // pred_fallthru
      _
    // Predicated region
    $region6: #{tpu_custom_call.1} parent=1 // pred_check
      _
    $region7: #{tpu_custom_call.1} parent=1 // pred_check_branch
      %22 = sbr.rel (0) target = $region9
    $region8: #{tpu_custom_call.1} parent=1 // pred_region
      %s24 = ssub.s32 64, 64
      %25 = vsyncadd [#allocation6], %s24
      %s27 = sshll.u32 [#allocation5], 4
      %s28 = int_to_ptr.vmem [resolvable:$true] %s27
      %30 = dma.hbm_to_vmem [thread:$0]  %s1, 64, %s28, [#allocation6]
    $region9: #{tpu_custom_call.1} parent=1 // pred_fallthru
      _
    // Predicated region
    $region10: #{tpu_custom_call.1} parent=1 // pred_check
      _
    $region11: #{tpu_custom_call.1} parent=1 // pred_check_branch
      %32 = sbr.rel (0) target = $region13
    $region12: #{tpu_custom_call.1} parent=1 // pred_region
      _
    $region13: #{tpu_custom_call.1} parent=1 // pred_fallthru
      _
    // Predicated region
    $region14: #{tpu_custom_call.1} parent=1 // pred_check
      _
    $region15: #{tpu_custom_call.1} parent=1 // pred_check_branch
      %34 = sbr.rel (0) target = $region17
    $region16: #{tpu_custom_call.1} parent=1 // pred_region
      %35 = dma.done [#allocation3], 64
    $region17: #{tpu_custom_call.1} parent=1 // pred_fallthru
      _
    // Predicated region
    $region18: #{tpu_custom_call.1} parent=1 // pred_check
      _
    $region19: #{tpu_custom_call.1} parent=1 // pred_check_branch
      %37 = sbr.rel (0) target = $region21
    $region20: #{tpu_custom_call.1} parent=1 // pred_region
      %38 = dma.done [#allocation6], 64
    $region21: #{tpu_custom_call.1} parent=1 // pred_fallthru
      _
    %v39 = vld [vmem:[#allocation2] sm:$0xf]
    %v40 = vcvt.s32.f32 %v39
    %v41 = vld [vmem:[#allocation5] sm:$0xf]
    %v42 = vld [vmem:[%s2] sm:$0x1]
    %44 = vset.pattern.permute.xlu0 0
    %45 = vperm.xlu0 %44, %v40
    %v46 = vpop.permute.xlu0 %45
    %v48 = vlaneseq
    %v49 = vshrl.u32 %v48, 7
    %v50 = vsub.s32 0, %v49
    %v51 = vrot.slane %v41, %v50
    %v52 = vmul.f32 %v46, %v51
    %v54 = vlaneseq
    %v55 = vshrl.u32 %v54, 7
    %v56 = vsub.s32 0, %v55
    %v57 = vrot.slane %v42, %v56
    %v59 = vadd.f32 %v57, %v52
    %60 = vset.pattern.permute.xlu0 1
    %61 = vperm.xlu0 %60, %v40
    %v62 = vpop.permute.xlu0 %61
    %v64 = vlaneseq
    %v65 = vshrl.u32 %v64, 7
    %v66 = vsub.s32 1, %v65
    %v67 = vrot.slane %v41, %v66
    %v68 = vmul.f32 %v62, %v67
    %v69 = vadd.f32 %v59, %v68
    %70 = vset.pattern.permute.xlu0 2
    %71 = vperm.xlu0 %70, %v40
    %v72 = vpop.permute.xlu0 %71
    %v74 = vlaneseq
    %v75 = vshrl.u32 %v74, 7
    %v76 = vsub.s32 2, %v75
    %v77 = vrot.slane %v41, %v76
    %v78 = vmul.f32 %v72, %v77
    %v79 = vadd.f32 %v69, %v78
    %80 = vset.pattern.permute.xlu0 3
    %81 = vperm.xlu0 %80, %v40
    %v82 = vpop.permute.xlu0 %81
    %v84 = vlaneseq
    %v85 = vshrl.u32 %v84, 7
    %v86 = vsub.s32 3, %v85
    %v87 = vrot.slane %v41, %v86
    %v88 = vmul.f32 %v82, %v87
    %v89 = vadd.f32 %v79, %v88
    %v90 = vand.u32 2147483647, %v89
    %vm91 = vcmp.le.f32.partialorder %v90, 0.7853982
    %vm92 = vcmp.lt.s32.totalorder %v89, 0
    %v93 = vand.u32 %v89, 2139095040
    %v94 = vshrl.u32 %v93, 23
    %v95 = vsub.s32 %v94, 127
    %v96 = vand.u32 2147483647, %v89
    %v97 = vand.u32 %v96, 8388607
    %v98 = vor.u32 %v97, 8388608
    %v99 = vsub.s32 0, %v98
    %v100 = vadd.s32 %v95, 1
    %vm101 = vcmp.gt.s32.totalorder %v100, 0
    %v102 = vsel %vm101, %v100, 0
    %v103 = vshrl.u32 %v102, 5
    %v104 = vand.u32 %v102, 31
    %v105 = vsub.s32 32, %v104
    %v106 = vshrl.u32 683565275, %v105
    %v107 = vshll.u32 683565275, %v104
    %v108 = vshrl.u32 2475754826, %v105
    %v109 = vor.u32 %v107, %v108
    %v110 = vshll.u32 2475754826, %v104
    %v111 = vshrl.u32 2131351028, %v105
    %v112 = vor.u32 %v110, %v111
    %v113 = vshll.u32 2131351028, %v104
    %v114 = vshrl.u32 2102212464, %v105
    %v115 = vor.u32 %v113, %v114
    %v116 = vshll.u32 2102212464, %v104
    %v117 = vshrl.u32 920167782, %v105
    %v118 = vor.u32 %v116, %v117
    %v119 = vshll.u32 920167782, %v104
    %v120 = vshrl.u32 1326507024, %v105
    %v121 = vor.u32 %v119, %v120
    %vm122 = vcmp.lt.s32.totalorder %v103, 1
    %vm123 = vcmp.lt.s32.totalorder %v103, 2
    %vm124 = vcmp.lt.s32.totalorder %v103, 3
    %vm125 = vcmp.lt.s32.totalorder %v103, 4
    %v126 = vsel %vm122, %v106, %v109
    %v127 = vsel %vm125, %v115, 2102212464
    %v128 = vsel %vm124, %v112, %v127
    %v129 = vsel %vm123, %v126, %v128
    %v130 = vsel %vm122, %v109, %v112
    %v131 = vsel %vm125, %v118, 920167782
    %v132 = vsel %vm124, %v115, %v131
    %v133 = vsel %vm123, %v130, %v132
    %v134 = vsel %vm122, %v112, %v115
    %v135 = vsel %vm125, %v121, 1326507024
    %v136 = vsel %vm124, %v118, %v135
    %v137 = vsel %vm123, %v134, %v136
    %v138 = vshll.u32 %v98, 8
    %v139 = vmul.u32.u64.compose %v138, %v137
    %v140 = vextract.low.u32 %v139
    %v141 = vextract.high.u32 %v139
    %v142 = vmul.u32.u64.compose %v138, %v133
    %v143 = vextract.low.u32 %v142
    %v144 = vextract.high.u32 %v142
    %v145 = vmul.u32 %v138, %v129
    %v146 = vadd.s32 %v141, %v143
    %vm147 = vc.u32 %v141, %v143
    %v148 = vadd.s32 %v144, 1
    %v149 = vsel %vm147, %v148, %v144
    %v150 = vadd.s32 %v145, %v149
    %v151 = vadd.s32 %v150, 536870912
    %v152 = vshrl.u32 %v151, 30
    %v153 = vshll.u32 %v152, 30
    %v154 = vsub.s32 %v150, %v153
    %vm155 = vcmp.lt.s32.totalorder %v154, 0
    %v156 = vsub.s32 0, %v154
    %v157 = vsel %vm155, %v156, %v154
    %v158 = vclz %v157
    %v159 = vsub.s32 %v158, 2
    %vm160 = vcmp.gt.s32.totalorder 0, %v159
    %v161 = vsel %vm160, 0, %v159
    %v162 = vsub.s32 32, %v161
    %v163 = vshll.u32 %v154, %v161
    %v164 = vshrl.u32 %v146, %v162
    %v165 = vor.u32 %v163, %v164
    %v166 = vsub.s32 4294967266, %v161
    %v167 = vadd.s32 %v166, 127
    %v168 = vshll.u32 %v167, 23
    %v169 = vor.u32 4788187, %v168
    %v170 = vand.u32 2147483647, %v169
    %v172 = vcvt.s32.f32 %v165
    %v173 = vmul.f32 %v172, %v170
    %v174 = vxor.u32 %v173, 2147483648
    %v175 = vsel %vm92, %v174, %v173
    %v176 = vsub.s32 4, %v152
    %v177 = vsel %vm92, %v176, %v152
    %v178 = vsel %vm91, %v89, %v175
    %v179 = vsel %vm91, 0, %v177
    %v180 = vcosq.f32.pop %v178
    %v181 = vsinq.f32.pop %v178
    %vm182 = vweird.f32 %v89
    %v183 = vadd.s32 %v179, 3
    %v184 = vand.u32 %v183, 3
    %vm185 = vcmp.lt.s32.totalorder %v184, 2
    %vm186 = vcmp.eq.s32.totalorder %v184, 0
    %v187 = vxor.u32 %v181, 2147483648
    %v188 = vsel %vm186, %v180, %v187
    %vm189 = vcmp.eq.s32.totalorder %v184, 2
    %v190 = vxor.u32 %v180, 2147483648
    %v191 = vsel %vm189, %v190, %v181
    %v192 = vsel %vm185, %v188, %v191
    %v193 = vsel %vm182, nan, %v192
    %194 = vst [vmem:[#allocation7] sm:$0xf] %v193
    // Predicated region
    $region22: #{tpu_custom_call.1} parent=1 // pred_check
      _
    $region23: #{tpu_custom_call.1} parent=1 // pred_check_branch
      %196 = sbr.rel (0) target = $region25
    $region24: #{tpu_custom_call.1} parent=1 // pred_region
      %s198 = ssub.s32 64, 64
      %199 = vsyncadd [#allocation4], %s198
      %s201 = sshll.u32 [#allocation7], 4
      %s202 = int_to_ptr.vmem [resolvable:$true] %s201
      %204 = dma.vmem_to_hbm [thread:$0]  %s202, 64, %s3, [#allocation4]
    $region25: #{tpu_custom_call.1} parent=1 // pred_fallthru
      _
    // Predicated region
    $region26: #{tpu_custom_call.1} parent=1 // pred_check
      _
    $region27: #{tpu_custom_call.1} parent=1 // pred_check_branch
      %206 = sbr.rel (0) target = $region29
    $region28: #{tpu_custom_call.1} parent=1 // pred_region
      %207 = dma.done [#allocation4], 64
    $region29: #{tpu_custom_call.1} parent=1 // pred_fallthru
      _
    %208 = vsyncpa [#allocation3], 1
    %209 = vsyncpa [#allocation6], 1
    %210 = vsyncpa [#allocation4], 1

</llo_original>
